<compile_context>
chip_gen: v7x
topology: tpu7x:2x2x1
jax: 0.10.0
libtpu: 0.0.40
codegen_flags: <defaults>
</compile_context>

<pallas_src>
import functools

import jax
import jax.numpy as jnp
from jax.experimental import pallas as pl
from jax.experimental.pallas import tpu as pltpu


def _round_up(n, m):
    return ((n + m - 1) // m) * m


def encoder_kernel(x_ref, w1_ref, b1_ref, wh_ref, bh_ref, mu_ref, sig_ref, *, z_dim):
    # x tile: (tile_b, C). Weights/biases are VMEM-resident (constant index_map).
    # In-kernel cast to the weight dtype (no-op for f32 params; bf16 MXU feed
    # otherwise) -- avoids a separate un-hidden XLA cast pass over x in HBM.
    x = x_ref[...].astype(w1_ref.dtype)

    # hidden = ReLU(x @ W1 + b1): f32 MXU accumulation, f32 bias/ReLU on the VPU.
    h = jnp.dot(x, w1_ref[...], preferred_element_type=jnp.float32) + b1_ref[...]
    h = jnp.maximum(h, 0.0)

    # Fused mu|sigma head: one matmul, then split into the two outputs.
    h = h.astype(wh_ref.dtype)
    out = jnp.dot(h, wh_ref[...], preferred_element_type=jnp.float32) + bh_ref[...]
    mu_ref[...] = out[:, :z_dim].astype(mu_ref.dtype)
    sig_ref[...] = out[:, z_dim:].astype(sig_ref.dtype)


def fuse_encoder_params(w1_t, b1, wmu_t, bmu, wsig_t, bsig, compute_dtype=None):
    """One-off parameter prep (do NOT call per forward pass).

    Fuses the mu/sigma head weights into a single (H, 2Z) matrix and applies
    the optional compute-dtype cast to the weights (tiny, one-off). Biases
    stay f32 (they are added after the f32 accumulation).
    """
    wh = jnp.concatenate([wmu_t, wsig_t], axis=1)          # (H, 2Z)
    bh = jnp.concatenate([bmu, bsig], axis=1)               # (1, 2Z)
    if compute_dtype is not None:
        w1_t = w1_t.astype(compute_dtype)
        wh = wh.astype(compute_dtype)
    return w1_t, b1.astype(jnp.float32), wh, bh.astype(jnp.float32)


def encoder_forward(x, w1_t, b1, wh, bh, *, tile_b=1024):
    """Encoder forward.

    x     : (B, C) activations, any float dtype already resident in HBM.
    w1_t  : (C, H)  first-layer weight, pre-transposed (from fuse_encoder_params).
    b1    : (1, H)  first-layer bias (f32).
    wh    : (H, 2Z) fused [Wmu | Wsig]^T.
    bh    : (1, 2Z) fused [bmu | bsig] (f32).
    tile_b: batch tile (multiple of 8). Default 1024; sweep 512-2048 for very
            large B. For B > tile_b the effective tile is capped so the grid
            has >= 4 steps (v7x dual-TensorCore).
    Returns (mu, sigma), each (B, Z) float32.
    """
    B, C = x.shape
    H = w1_t.shape[1]
    Z = wh.shape[1] // 2

    # ---- batch tiling: no padding of B; Pallas masks the partial last block ----
    tile_b = max(8, (int(tile_b) // 8) * 8)
    if B <= tile_b:
        tile_b_eff = _round_up(B, 8)
    else:
        min_blocks = 4  # keep >=4 grid steps so both v7x TensorCores get work
        per_block = _round_up(pl.cdiv(B, min_blocks), 8)
        tile_b_eff = max(8, min(tile_b, per_block))
    grid = (pl.cdiv(B, tile_b_eff),)

    out_dtype = jnp.float32
    out_bytes = 2 * B * Z * jnp.dtype(out_dtype).itemsize
    cost = pl.CostEstimate(
        flops=2 * B * (C * H + H * 2 * Z),
        transcendentals=0,
        bytes_accessed=(x.nbytes + w1_t.nbytes + b1.nbytes
                        + wh.nbytes + bh.nbytes + out_bytes),
    )

    # ---- explicit VMEM budget (double-buffered tiles + weights, big headroom) ----
    footprint = (
        2 * tile_b_eff * C * x.dtype.itemsize                       # x tiles
        + 2 * 2 * tile_b_eff * Z * jnp.dtype(out_dtype).itemsize    # mu/sigma tiles
        + 2 * (w1_t.nbytes + b1.nbytes + wh.nbytes + bh.nbytes)     # params
    )
    vmem_limit = int(min(64 << 20, max(8 << 20, 4 * footprint + (2 << 20))))

    mu, sigma = pl.pallas_call(
        functools.partial(encoder_kernel, z_dim=Z),
        out_shape=(
            jax.ShapeDtypeStruct((B, Z), out_dtype),
            jax.ShapeDtypeStruct((B, Z), out_dtype),
        ),
        grid_spec=pltpu.PrefetchScalarGridSpec(
            num_scalar_prefetch=0,
            grid=grid,
            in_specs=[
                pl.BlockSpec((tile_b_eff, C), lambda i: (i, 0)),   # x tile
                pl.BlockSpec((C, H),          lambda i: (0, 0)),   # W1^T
                pl.BlockSpec((1, H),          lambda i: (0, 0)),   # b1
                pl.BlockSpec((H, 2 * Z),      lambda i: (0, 0)),   # [Wmu|Wsig]^T
                pl.BlockSpec((1, 2 * Z),      lambda i: (0, 0)),   # [bmu|bsig]
            ],
            out_specs=[
                pl.BlockSpec((tile_b_eff, Z), lambda i: (i, 0)),   # mu
                pl.BlockSpec((tile_b_eff, Z), lambda i: (i, 0)),   # sigma
            ],
        ),
        compiler_params=pltpu.CompilerParams(
            dimension_semantics=("parallel",),
            vmem_limit_bytes=vmem_limit,
        ),
        cost_estimate=cost,
    )(x, w1_t, b1, wh, bh)
    return mu, sigma


if __name__ == "__main__":
    # Shapes consistent with the module: Linear(num_channels -> hidden_size),
    # two Linear(hidden_size -> z_dim) heads.
    num_channels, hidden_size, z_dim = 32, 64, 16

    key = jax.random.PRNGKey(0)
    kx, k1, k2, k3, k4, k5, k6, kx2, kx3 = jax.random.split(key, 9)

    # Deterministic parameter init (PyTorch Linear weight is (out, in);
    # we store the transpose (in, out) for the kernel).
    scale1 = 1.0 / jnp.sqrt(num_channels)
    scale2 = 1.0 / jnp.sqrt(hidden_size)
    w1_t   = jax.random.uniform(k1, (num_channels, hidden_size), jnp.float32, -scale1, scale1)
    b1     = jax.random.uniform(k2, (1, hidden_size), jnp.float32, -scale1, scale1)
    wmu_t  = jax.random.uniform(k3, (hidden_size, z_dim), jnp.float32, -scale2, scale2)
    bmu    = jax.random.uniform(k4, (1, z_dim), jnp.float32, -scale2, scale2)
    wsig_t = jax.random.uniform(k5, (hidden_size, z_dim), jnp.float32, -scale2, scale2)
    bsig   = jax.random.uniform(k6, (1, z_dim), jnp.float32, -scale2, scale2)

    def reference(xv):
        h_ref = jnp.maximum(xv @ w1_t + b1, 0.0)
        return h_ref @ wmu_t + bmu, h_ref @ wsig_t + bsig

    # One-off parameter prep (head fusion + optional weight dtype cast).
    params_f32 = fuse_encoder_params(w1_t, b1, wmu_t, bmu, wsig_t, bsig)
    params_bf16 = fuse_encoder_params(w1_t, b1, wmu_t, bmu, wsig_t, bsig,
                                      compute_dtype=jnp.bfloat16)

    # --- f32 path, small batch (single block) ---
    batch = 16
    x = jax.random.normal(kx, (batch, num_channels), dtype=jnp.float32)
    mu, sigma = encoder_forward(x, *params_f32)
    jax.block_until_ready((mu, sigma))
    mu_r, sig_r = reference(x)
    assert mu.shape == (batch, z_dim) and sigma.shape == (batch, z_dim)
    assert jnp.allclose(mu, mu_r, atol=1e-5), "mu mismatch (f32)"
    assert jnp.allclose(sigma, sig_r, atol=1e-5), "sigma mismatch (f32)"

    # --- bf16 feed path, non-divisible batch (partial block, in-kernel cast) ---
    batch2 = 13
    x2 = jax.random.normal(kx2, (batch2, num_channels), dtype=jnp.float32)
    mu2, sigma2 = encoder_forward(x2, *params_bf16)
    jax.block_until_ready((mu2, sigma2))
    mu2_r, sig2_r = reference(x2)
    assert mu2.shape == (batch2, z_dim) and sigma2.shape == (batch2, z_dim)
    # Note: hidden activations are re-quantized to bf16 between the two layers.
    assert jnp.allclose(mu2, mu2_r, atol=5e-2, rtol=5e-2), "mu mismatch (bf16)"
    assert jnp.allclose(sigma2, sig2_r, atol=5e-2, rtol=5e-2), "sigma mismatch (bf16)"

    # --- f32 path, multi-block grid with a masked partial last block ---
    batch3 = 300
    x3 = jax.random.normal(kx3, (batch3, num_channels), dtype=jnp.float32)
    mu3, sigma3 = encoder_forward(x3, *params_f32, tile_b=64)  # grid = 5, last block partial
    jax.block_until_ready((mu3, sigma3))
    mu3_r, sig3_r = reference(x3)
    assert mu3.shape == (batch3, z_dim) and sigma3.shape == (batch3, z_dim)
    assert jnp.allclose(mu3, mu3_r, atol=1e-5), "mu mismatch (multi-block)"
    assert jnp.allclose(sigma3, sig3_r, atol=1e-5), "sigma mismatch (multi-block)"

    print("KERNEL_OK")
</pallas_src>

<mosaic_0001>
module attributes {stable_mosaic.version = 11 : i64} {
  func.func @encoder_kernel(%arg0: i32, %arg1: memref<16x32xf32, #tpu.memory_space<vmem>>, %arg2: memref<32x64xf32, #tpu.memory_space<vmem>>, %arg3: memref<1x64xf32, #tpu.memory_space<vmem>>, %arg4: memref<64x32xf32, #tpu.memory_space<vmem>>, %arg5: memref<1x32xf32, #tpu.memory_space<vmem>>, %arg6: memref<16x16xf32, #tpu.memory_space<vmem>>, %arg7: memref<16x16xf32, #tpu.memory_space<vmem>>) attributes {dimension_semantics = [#tpu.dimension_semantics<parallel>], iteration_bounds = array<i64: 1>, scalar_prefetch = 0 : i64, scratch_operands = 0 : i64, tpu.core_type = #tpu.core_type<tc>, window_params = [{transform_indices = @transform_0, window_bounds = array<i64: 16, 32>}, {pipeline_mode = #tpu.pipeline_mode<synchronous>, transform_indices = @transform_1, window_bounds = array<i64: 32, 64>}, {pipeline_mode = #tpu.pipeline_mode<synchronous>, transform_indices = @transform_2, window_bounds = array<i64: 1, 64>}, {pipeline_mode = #tpu.pipeline_mode<synchronous>, transform_indices = @transform_3, window_bounds = array<i64: 64, 32>}, {pipeline_mode = #tpu.pipeline_mode<synchronous>, transform_indices = @transform_4, window_bounds = array<i64: 1, 32>}, {transform_indices = @transform_5, window_bounds = array<i64: 16, 16>}, {transform_indices = @transform_6, window_bounds = array<i64: 16, 16>}]} {
    %c0 = arith.constant 0 : index
    %c0_0 = arith.constant 0 : index
    %0 = vector.load %arg1[%c0, %c0_0] : memref<16x32xf32, #tpu.memory_space<vmem>>, vector<16x32xf32>
    %c0_1 = arith.constant 0 : index
    %c0_2 = arith.constant 0 : index
    %1 = vector.load %arg2[%c0_1, %c0_2] : memref<32x64xf32, #tpu.memory_space<vmem>>, vector<32x64xf32>
    %cst = arith.constant dense<0.000000e+00> : vector<16x64xf32>
    %2 = tpu.matmul %0, %1, %cst {dimension_numbers = #tpu.dot_dimension_numbers<[1], [0], [0], [1], [0, 0, 1, 1], [], []>} : vector<16x32xf32>, vector<32x64xf32>, vector<16x64xf32> -> vector<16x64xf32>
    %c0_3 = arith.constant 0 : index
    %c0_4 = arith.constant 0 : index
    %3 = vector.load %arg3[%c0_3, %c0_4] : memref<1x64xf32, #tpu.memory_space<vmem>>, vector<1x64xf32>
    %4 = vector.broadcast %3 : vector<1x64xf32> to vector<16x64xf32>
    %5 = arith.addf %2, %4 : vector<16x64xf32>
    %cst_5 = arith.constant 0.000000e+00 : f32
    %6 = vector.broadcast %cst_5 : f32 to vector<16x64xf32>
    %7 = arith.maximumf %5, %6 : vector<16x64xf32>
    %c0_6 = arith.constant 0 : index
    %c0_7 = arith.constant 0 : index
    %8 = vector.load %arg4[%c0_6, %c0_7] : memref<64x32xf32, #tpu.memory_space<vmem>>, vector<64x32xf32>
    %cst_8 = arith.constant dense<0.000000e+00> : vector<16x32xf32>
    %9 = tpu.matmul %7, %8, %cst_8 {dimension_numbers = #tpu.dot_dimension_numbers<[1], [0], [0], [1], [0, 0, 1, 1], [], []>} : vector<16x64xf32>, vector<64x32xf32>, vector<16x32xf32> -> vector<16x32xf32>
    %c0_9 = arith.constant 0 : index
    %c0_10 = arith.constant 0 : index
    %10 = vector.load %arg5[%c0_9, %c0_10] : memref<1x32xf32, #tpu.memory_space<vmem>>, vector<1x32xf32>
    %11 = vector.broadcast %10 : vector<1x32xf32> to vector<16x32xf32>
    %12 = arith.addf %9, %11 : vector<16x32xf32>
    %13 = vector.extract_strided_slice %12 {offsets = [0, 0], sizes = [16, 16], strides = [1, 1]} : vector<16x32xf32> to vector<16x16xf32>
    %c0_11 = arith.constant 0 : index
    %c0_12 = arith.constant 0 : index
    %14 = vector.load %arg6[%c0_11, %c0_12] : memref<16x16xf32, #tpu.memory_space<vmem>>, vector<16x16xf32>
    tpu.vector_store %arg6[%c0_11, %c0_12], %13 {strides = array<i32>} : memref<16x16xf32, #tpu.memory_space<vmem>>, vector<16x16xf32>,
    %15 = vector.extract_strided_slice %12 {offsets = [0, 16], sizes = [16, 16], strides = [1, 1]} : vector<16x32xf32> to vector<16x16xf32>
    %c0_13 = arith.constant 0 : index
    %c0_14 = arith.constant 0 : index
    %16 = vector.load %arg7[%c0_13, %c0_14] : memref<16x16xf32, #tpu.memory_space<vmem>>, vector<16x16xf32>
    tpu.vector_store %arg7[%c0_13, %c0_14], %15 {strides = array<i32>} : memref<16x16xf32, #tpu.memory_space<vmem>>, vector<16x16xf32>,
    return
  }
  func.func @transform_0(%arg0: i32) -> (i32, i32) {
    %c0_i32 = arith.constant 0 : i32
    %c0_i32_0 = arith.constant 0 : i32
    return %arg0, %c0_i32 : i32, i32
  }
  func.func @transform_1(%arg0: i32) -> (i32, i32) {
    %c0_i32 = arith.constant 0 : i32
    %c0_i32_0 = arith.constant 0 : i32
    %c0_i32_1 = arith.constant 0 : i32
    return %c0_i32, %c0_i32_0 : i32, i32
  }
  func.func @transform_2(%arg0: i32) -> (i32, i32) {
    %c0_i32 = arith.constant 0 : i32
    %c0_i32_0 = arith.constant 0 : i32
    %c0_i32_1 = arith.constant 0 : i32
    return %c0_i32, %c0_i32_0 : i32, i32
  }
  func.func @transform_3(%arg0: i32) -> (i32, i32) {
    %c0_i32 = arith.constant 0 : i32
    %c0_i32_0 = arith.constant 0 : i32
    %c0_i32_1 = arith.constant 0 : i32
    return %c0_i32, %c0_i32_0 : i32, i32
  }
  func.func @transform_4(%arg0: i32) -> (i32, i32) {
    %c0_i32 = arith.constant 0 : i32
    %c0_i32_0 = arith.constant 0 : i32
    %c0_i32_1 = arith.constant 0 : i32
    return %c0_i32, %c0_i32_0 : i32, i32
  }
  func.func @transform_5(%arg0: i32) -> (i32, i32) {
    %c0_i32 = arith.constant 0 : i32
    %c0_i32_0 = arith.constant 0 : i32
    return %arg0, %c0_i32 : i32, i32
  }
  func.func @transform_6(%arg0: i32) -> (i32, i32) {
    %c0_i32 = arith.constant 0 : i32
    %c0_i32_0 = arith.constant 0 : i32
    return %arg0, %c0_i32 : i32, i32
  }
}

</mosaic_0001>

<llo_original>
// kernel: tpu_custom_call.1
$region0: #{tpu_custom_call.1}
  #allocation0 [shape = 'u32[]', space=smem, size = 0x4, offset = 0x4, fixed_abs, tag = 'smem constant byte address 0x4 - core index']
  #allocation1 [shape = 'u32[144,128]{1,0:T(1,128)}', space=vmem, size = 0x12000, scoped, tag = 'internal scratch']
  %s0 = inlined_call_operand.vmem [shape: f32[16,32], index: 0, kind: input, shape index: {}]
  %s1 = inlined_call_operand.vmem [shape: f32[32,64], index: 1, kind: input, shape index: {}]
  %s2 = inlined_call_operand.vmem [shape: f32[1,64], index: 2, kind: input, shape index: {}]
  %s3 = inlined_call_operand.vmem [shape: f32[64,32], index: 3, kind: input, shape index: {}]
  %s4 = inlined_call_operand.vmem [shape: f32[1,32], index: 4, kind: input, shape index: {}]
  %s5 = inlined_call_operand.hbm [shape: f32[16,16], index: 5, kind: output, shape index: {0}]
  %s6 = inlined_call_operand.hbm [shape: f32[16,16], index: 6, kind: output, shape index: {1}]
  %7 = xla_tuple %s5, %s6
  %s8 = sld [smem:[#allocation0]]
  $region38: #{tpu_custom_call.1} parent=0
    _
  %s10 = ssub.s32 1, %s8
  %s11 = scalar_select 0, %s10, %s8
  $region1: #{tpu_custom_call.1} parent=0
    #allocation2 [shape = 'u8[8192]{0}', space=vmem, size = 0x2000, scoped, tag = 'output window, operand 0, single buffered']
    #allocation3 [shape = 's32[1]{0}', space=sflag, size = 0x4, scoped, tag = 'scoped memory for tpu_custom_call.1']
    #allocation4 [shape = 'u8[8192]{0}', space=vmem, size = 0x2000, scoped, tag = 'output window, operand 1, single buffered']
    #allocation5 [shape = 's32[1]{0}', space=sflag, size = 0x4, scoped, tag = 'scoped memory for tpu_custom_call.1']
    %12 = vsyncpa [#allocation3], 0
    %13 = vsyncpa [#allocation5], 0
    // Predicated region
    $region2: #{tpu_custom_call.1} parent=1 // pred_check
      _
    $region3: #{tpu_custom_call.1} parent=1 // pred_check_branch
      %15 = sbr.rel (0) target = $region5
    $region4: #{tpu_custom_call.1} parent=1 // pred_region
      _
    $region5: #{tpu_custom_call.1} parent=1 // pred_fallthru
      _
    // Predicated region
    $region6: #{tpu_custom_call.1} parent=1 // pred_check
      _
    $region7: #{tpu_custom_call.1} parent=1 // pred_check_branch
      %17 = sbr.rel (0) target = $region9
    $region8: #{tpu_custom_call.1} parent=1 // pred_region
      _
    $region9: #{tpu_custom_call.1} parent=1 // pred_fallthru
      _
    // Predicated region
    $region10: #{tpu_custom_call.1} parent=1 // pred_check
      _
    $region11: #{tpu_custom_call.1} parent=1 // pred_check_branch
      %19 = sbr.rel (0) target = $region13
    $region12: #{tpu_custom_call.1} parent=1 // pred_region
      _
    $region13: #{tpu_custom_call.1} parent=1 // pred_fallthru
      _
    // Predicated region
    $region14: #{tpu_custom_call.1} parent=1 // pred_check
      _
    $region15: #{tpu_custom_call.1} parent=1 // pred_check_branch
      %21 = sbr.rel (0) target = $region17
    $region16: #{tpu_custom_call.1} parent=1 // pred_region
      _
    $region17: #{tpu_custom_call.1} parent=1 // pred_fallthru
      _
    // Predicated region
    $region18: #{tpu_custom_call.1} parent=1 // pred_check
      _
    $region19: #{tpu_custom_call.1} parent=1 // pred_check_branch
      %23 = sbr.rel (0) target = $region21
    $region20: #{tpu_custom_call.1} parent=1 // pred_region
      _
    $region21: #{tpu_custom_call.1} parent=1 // pred_fallthru
      _
    %v24 = vld [vmem:[%s0] sm:$0xff]
    %v25 = vld [vmem:[%s0 + $0x8] sm:$0xff]
    %v26 = vld [vmem:[%s1] sm:$0xff]
    %v27 = vld [vmem:[%s1 + $0x8] sm:$0xff]
    %v28 = vld [vmem:[%s1 + $0x10] sm:$0xff]
    %v29 = vld [vmem:[%s1 + $0x18] sm:$0xff]
    %v30 = vld [vmem:[%s2] sm:$0x1]
    %v32 = vlaneseq
    %v33 = vshrl.u32 %v32, 7
    %v34 = vsub.s32 0, %v33
    %v35 = vrot.slane %v30, %v34
    %vm37 = vcmask 261120
    %v39 = vsel %vm37, %v24, 0
    %v42 = vsel %vm37, %v25, 0
    %44 = vmatprep.subr.mxu0 0.0
    %45 = vmatpush1.msra.mxu0 %v26
    %46 = vmatprep.subr.mxu0 0.0
    %47 = vmatpush1.msra.mxu0 %v27
    %48 = vmatprep.subr.mxu0 0.0
    %49 = vmatpush1.msra.mxu0 %v28
    %50 = vmatprep.subr.mxu0 0.0
    %51 = vmatpush1.msra.mxu0 %v29
    %52 = vmatprep.subr.mxu0 0.0
    %53 = vmatpush1.msra.mxu0 0.0
    %54 = vmatprep.subr.mxu0 0.0
    %55 = vmatpush1.msra.mxu0 0.0
    %56 = vmatprep.subr.mxu0 0.0
    %57 = vmatpush1.msra.mxu0 0.0
    %58 = vmatprep.subr.mxu0 0.0
    %59 = vmatpush1.msra.mxu0 0.0
    %60 = vmatprep.subr.mxu0 0.0
    %61 = vmatpush1.msra.mxu0 0.0
    %62 = vmatprep.subr.mxu0 0.0
    %63 = vmatpush1.msra.mxu0 0.0
    %64 = vmatprep.subr.mxu0 0.0
    %65 = vmatpush1.msra.mxu0 0.0
    %66 = vmatprep.subr.mxu0 0.0
    %67 = vmatpush1.msra.mxu0 0.0
    %68 = vmatprep.subr.mxu0 0.0
    %69 = vmatpush1.msra.mxu0 0.0
    %70 = vmatprep.subr.mxu0 0.0
    %71 = vmatpush1.msra.mxu0 0.0
    %72 = vmatprep.subr.mxu0 0.0
    %73 = vmatpush1.msra.mxu0 0.0
    %74 = vmatprep.subr.mxu0 0.0
    %75 = vmatpush1.msra.mxu0 0.0
    %76 = vmatprep.subr.mxu0 0.0
    %77 = vmatpush1.msra.mxu0 0.0
    %78 = vmatprep.subr.mxu0 0.0
    %79 = vmatpush1.msra.mxu0 0.0
    %80 = vmatprep.subr.mxu0 0.0
    %81 = vmatpush1.msra.mxu0 0.0
    %82 = vmatprep.subr.mxu0 0.0
    %83 = vmatpush1.msra.mxu0 0.0
    %84 = vmatprep.subr.mxu0 0.0
    %85 = vmatpush1.msra.mxu0 0.0
    %86 = vmatprep.subr.mxu0 0.0
    %87 = vmatpush1.msra.mxu0 0.0
    %88 = vmatprep.subr.mxu0 0.0
    %89 = vmatpush1.msra.mxu0 0.0
    %90 = vmatprep.subr.mxu0 0.0
    %91 = vmatpush1.msra.mxu0 0.0
    %92 = vmatprep.subr.mxu0 0.0
    %93 = vmatpush1.msra.mxu0 0.0
    %94 = vmatprep.subr.mxu0 0.0
    %95 = vmatpush1.msra.mxu0 0.0
    %96 = vmatprep.subr.mxu0 0.0
    %97 = vmatpush1.msra.mxu0 0.0
    %98 = vmatprep.subr.mxu0 0.0
    %99 = vmatpush1.msra.mxu0 0.0
    %100 = vmatprep.subr.mxu0 0.0
    %101 = vmatpush1.msra.mxu0 0.0
    %102 = vmatprep.subr.mxu0 0.0
    %103 = vmatpush1.msra.mxu0 0.0
    %104 = vmatprep.subr.mxu0 0.0
    %105 = vmatpush1.msra.mxu0 0.0
    %106 = vmatprep.subr.mxu0 0.0
    %107 = vmatpush1.msra.mxu0 0.0
    %108 = vmatprep.mubr.f32.mxu0 0.0
    %109 = vmatmul.mubr.f32.gmra.mrb[0].mxu0 %v39
    %v110 = vpop.f32.mrb[0].mxu0
    %v111 = vadd.f32 %v35, %v110
    %v112 = vpop.f32.mrb[0].mxu0
    %113 = vmatprep.mubr.f32.mxu0 0.0
    %114 = vmatmul.mubr.f32.gmra.mrb[0].mxu0 %v42
    %v115 = vpop.f32.mrb[0].mxu0
    %v116 = vadd.f32 %v35, %v115
    %v117 = vpop.f32.mrb[0].mxu0
    %118 = vdwg.mxu0
    %v119 = vmax.f32 %v111, 0.0
    %v120 = vmax.f32 %v116, 0.0
    %v121 = vld [vmem:[%s3] sm:$0xff]
    %v122 = vld [vmem:[%s3 + $0x8] sm:$0xff]
    %v123 = vld [vmem:[%s3 + $0x10] sm:$0xff]
    %v124 = vld [vmem:[%s3 + $0x18] sm:$0xff]
    %v125 = vld [vmem:[%s3 + $0x20] sm:$0xff]
    %v126 = vld [vmem:[%s3 + $0x28] sm:$0xff]
    %v127 = vld [vmem:[%s3 + $0x30] sm:$0xff]
    %v128 = vld [vmem:[%s3 + $0x38] sm:$0xff]
    %v129 = vld [vmem:[%s4] sm:$0x1]
    %v131 = vlaneseq
    %v132 = vshrl.u32 %v131, 7
    %v133 = vsub.s32 0, %v132
    %v134 = vrot.slane %v129, %v133
    %vm136 = vcmask 523264
    %v138 = vsel %vm136, %v119, 0
    %v141 = vsel %vm136, %v120, 0
    %143 = vmatprep.subr.mxu0 0.0
    %144 = vmatpush1.msra.mxu0 %v121
    %145 = vmatprep.subr.mxu0 0.0
    %146 = vmatpush1.msra.mxu0 %v122
    %147 = vmatprep.subr.mxu0 0.0
    %148 = vmatpush1.msra.mxu0 %v123
    %149 = vmatprep.subr.mxu0 0.0
    %150 = vmatpush1.msra.mxu0 %v124
    %151 = vmatprep.subr.mxu0 0.0
    %152 = vmatpush1.msra.mxu0 %v125
    %153 = vmatprep.subr.mxu0 0.0
    %154 = vmatpush1.msra.mxu0 %v126
    %155 = vmatprep.subr.mxu0 0.0
    %156 = vmatpush1.msra.mxu0 %v127
    %157 = vmatprep.subr.mxu0 0.0
    %158 = vmatpush1.msra.mxu0 %v128
    %159 = vmatprep.subr.mxu0 0.0
    %160 = vmatpush1.msra.mxu0 0.0
    %161 = vmatprep.subr.mxu0 0.0
    %162 = vmatpush1.msra.mxu0 0.0
    %163 = vmatprep.subr.mxu0 0.0
    %164 = vmatpush1.msra.mxu0 0.0
    %165 = vmatprep.subr.mxu0 0.0
    %166 = vmatpush1.msra.mxu0 0.0
    %167 = vmatprep.subr.mxu0 0.0
    %168 = vmatpush1.msra.mxu0 0.0
    %169 = vmatprep.subr.mxu0 0.0
    %170 = vmatpush1.msra.mxu0 0.0
    %171 = vmatprep.subr.mxu0 0.0
    %172 = vmatpush1.msra.mxu0 0.0
    %173 = vmatprep.subr.mxu0 0.0
    %174 = vmatpush1.msra.mxu0 0.0
    %175 = vmatprep.subr.mxu0 0.0
    %176 = vmatpush1.msra.mxu0 0.0
    %177 = vmatprep.subr.mxu0 0.0
    %178 = vmatpush1.msra.mxu0 0.0
    %179 = vmatprep.subr.mxu0 0.0
    %180 = vmatpush1.msra.mxu0 0.0
    %181 = vmatprep.subr.mxu0 0.0
    %182 = vmatpush1.msra.mxu0 0.0
    %183 = vmatprep.subr.mxu0 0.0
    %184 = vmatpush1.msra.mxu0 0.0
    %185 = vmatprep.subr.mxu0 0.0
    %186 = vmatpush1.msra.mxu0 0.0
    %187 = vmatprep.subr.mxu0 0.0
    %188 = vmatpush1.msra.mxu0 0.0
    %189 = vmatprep.subr.mxu0 0.0
    %190 = vmatpush1.msra.mxu0 0.0
    %191 = vmatprep.subr.mxu0 0.0
    %192 = vmatpush1.msra.mxu0 0.0
    %193 = vmatprep.subr.mxu0 0.0
    %194 = vmatpush1.msra.mxu0 0.0
    %195 = vmatprep.subr.mxu0 0.0
    %196 = vmatpush1.msra.mxu0 0.0
    %197 = vmatprep.subr.mxu0 0.0
    %198 = vmatpush1.msra.mxu0 0.0
    %199 = vmatprep.subr.mxu0 0.0
    %200 = vmatpush1.msra.mxu0 0.0
    %201 = vmatprep.subr.mxu0 0.0
    %202 = vmatpush1.msra.mxu0 0.0
    %203 = vmatprep.subr.mxu0 0.0
    %204 = vmatpush1.msra.mxu0 0.0
    %205 = vmatprep.subr.mxu0 0.0
    %206 = vmatpush1.msra.mxu0 0.0
    %207 = vmatprep.mubr.f32.mxu0 0.0
    %208 = vmatmul.mubr.f32.gmra.mrb[0].mxu0 %v138
    %v209 = vpop.f32.mrb[0].mxu0
    %v210 = vadd.f32 %v134, %v209
    %v211 = vpop.f32.mrb[0].mxu0
    %212 = vmatprep.mubr.f32.mxu0 0.0
    %213 = vmatmul.mubr.f32.gmra.mrb[0].mxu0 %v141
    %v214 = vpop.f32.mrb[0].mxu0
    %v215 = vadd.f32 %v134, %v214
    %v216 = vpop.f32.mrb[0].mxu0
    %217 = vdwg.mxu0
    %vm218 = vcmask 130048
    %219 = vst.msk [vmem:[#allocation2] sm:$0xff] %vm218, %v210
    %220 = vst.msk [vmem:[#allocation2 + $0x8] sm:$0xff] %vm218, %v215
    %223 = vrot.lane.b32.xlu0 %v210, 112
    %v224 = vpop.permute.xlu0 %223
    %225 = vrot.lane.b32.xlu0 %v215, 112
    %v226 = vpop.permute.xlu0 %225
    %229 = vst.msk [vmem:[#allocation4] sm:$0xff] %vm218, %v224
    %230 = vst.msk [vmem:[#allocation4 + $0x8] sm:$0xff] %vm218, %v226
    // Predicated region
    $region22: #{tpu_custom_call.1} parent=1 // pred_check
      _
    $region23: #{tpu_custom_call.1} parent=1 // pred_check_branch
      %232 = sbr.rel (0) target = $region25
    $region24: #{tpu_custom_call.1} parent=1 // pred_region
      %s234 = ssub.s32 256, 256
      %235 = vsyncadd [#allocation3], %s234
      %s236 = sshll.u32 [#allocation2], 4
      %s237 = int_to_ptr.vmem [resolvable:$true] %s236
      %242 = dma.vmem_to_hbm [thread:$0]  %s237, 256, %s5, [#allocation3], 128, 128, 8
    $region25: #{tpu_custom_call.1} parent=1 // pred_fallthru
      _
    // Predicated region
    $region26: #{tpu_custom_call.1} parent=1 // pred_check
      _
    $region27: #{tpu_custom_call.1} parent=1 // pred_check_branch
      %244 = sbr.rel (0) target = $region29
    $region28: #{tpu_custom_call.1} parent=1 // pred_region
      %s246 = ssub.s32 256, 256
      %247 = vsyncadd [#allocation5], %s246
      %s248 = sshll.u32 [#allocation4], 4
      %s249 = int_to_ptr.vmem [resolvable:$true] %s248
      %254 = dma.vmem_to_hbm [thread:$0]  %s249, 256, %s6, [#allocation5], 128, 128, 8
    $region29: #{tpu_custom_call.1} parent=1 // pred_fallthru
      _
    // Predicated region
    $region30: #{tpu_custom_call.1} parent=1 // pred_check
      _
    $region31: #{tpu_custom_call.1} parent=1 // pred_check_branch
      %256 = sbr.rel (0) target = $region33
    $region32: #{tpu_custom_call.1} parent=1 // pred_region
      %257 = dma.done [#allocation3], 256
    $region33: #{tpu_custom_call.1} parent=1 // pred_fallthru
      _
    // Predicated region
    $region34: #{tpu_custom_call.1} parent=1 // pred_check
      _
    $region35: #{tpu_custom_call.1} parent=1 // pred_check_branch
      %259 = sbr.rel (0) target = $region37
    $region36: #{tpu_custom_call.1} parent=1 // pred_region
      %260 = dma.done [#allocation5], 256
    $region37: #{tpu_custom_call.1} parent=1 // pred_fallthru
      _
    %261 = vsyncpa [#allocation3], 1
    %262 = vsyncpa [#allocation5], 1

</llo_original>
